<compile_context>
chip_gen: v7x
topology: tpu7x:2x2x1
jax: 0.10.0
libtpu: 0.0.40
codegen_flags: <defaults>
</compile_context>

<pallas_src>
import jax
import jax.numpy as jnp
from jax.experimental import pallas as pl
from jax.experimental.pallas import tpu as pltpu


def _round_up(x: int, m: int) -> int:
    return ((x + m - 1) // m) * m


def _linear_kernel(x_ref, w_ref, b_ref, o_ref):
    # x_ref: [TM, K]  native dtype (VMEM)
    # w_ref: [K, N]   native dtype (VMEM, resident across grid steps)
    # b_ref: [1, N]   f32          (VMEM, resident across grid steps)
    # o_ref: [TM, N]  out dtype    (VMEM)
    acc = jnp.dot(x_ref[...], w_ref[...], preferred_element_type=jnp.float32)
    o_ref[...] = (acc + b_ref[...]).astype(o_ref.dtype)


def classification_head(hidden_state, weight, bias, *, tm: int = 8192):
    """Pallas implementation of ClassificationHead.forward.

    Args:
      hidden_state: [batch, ..., in_features] array (f32 or bf16)
      weight:       [num_labels, in_features] (PyTorch nn.Linear layout)
      bias:         [num_labels]
      tm:           max row-tile size (rows per grid step); rounded up to 8
    Returns:
      logits: [batch, ..., num_labels], same dtype as hidden_state
    """
    *lead, in_features = hidden_state.shape
    num_labels = weight.shape[0]
    assert weight.shape == (num_labels, in_features)
    assert bias.shape == (num_labels,)

    m = 1
    for d in lead:
        m *= d

    out_dtype = hidden_state.dtype
    full_out_shape = (*lead, num_labels)

    # Degenerate / empty input: nothing to launch.
    if m == 0:
        return jnp.zeros(full_out_shape, out_dtype)

    # Activations in native dtype (no extra HBM cast pass).
    x2d = hidden_state.reshape(m, in_features)
    # One-time wrapper transpose of the tiny weight to [K, N]; match x's dtype
    # so the MXU sees a homogeneous-dtype matmul.
    w_t = weight.astype(x2d.dtype).T
    b2d = bias.astype(jnp.float32).reshape(1, num_labels)

    # --- Row-tile sizing ------------------------------------------------
    tm = max(8, _round_up(tm, 8))                 # user tm -> multiple of 8
    tile_m = min(tm, _round_up(m, 8))             # never bigger than needed
    if m > 8:
        # Keep >= 2 grid steps so v7x's second TensorCore gets work on the
        # "parallel" axis (negligible cost on v5e/v6e).
        tile_m = min(tile_m, _round_up(pl.cdiv(m, 2), 8))
    grid = (pl.cdiv(m, tile_m),)

    # Advisory cost estimate for XLA's scheduler.
    x_bytes = jnp.dtype(x2d.dtype).itemsize
    o_bytes = jnp.dtype(out_dtype).itemsize
    cost = pl.CostEstimate(
        flops=2 * m * in_features * num_labels,
        transcendentals=0,
        bytes_accessed=(m * in_features * x_bytes
                        + in_features * num_labels * x_bytes
                        + num_labels * 4
                        + m * num_labels * o_bytes),
    )

    out2d = pl.pallas_call(
        _linear_kernel,
        out_shape=jax.ShapeDtypeStruct((m, num_labels), out_dtype),
        grid_spec=pl.GridSpec(
            grid=grid,
            in_specs=[
                # Activation tile: streamed per grid step.
                pl.BlockSpec((tile_m, in_features), lambda i: (i, 0)),
                # Weight / bias: constant block index -> VMEM-resident.
                pl.BlockSpec((in_features, num_labels), lambda i: (0, 0)),
                pl.BlockSpec((1, num_labels), lambda i: (0, 0)),
            ],
            out_specs=pl.BlockSpec((tile_m, num_labels), lambda i: (i, 0)),
        ),
        compiler_params=pltpu.CompilerParams(
            dimension_semantics=("parallel",),
            # ~16 MiB of double-buffered tiles at TM=8192 f32 (lane-padded);
            # 32 MiB fits v5e/v6e/v7x scoped VMEM on all generations.
            vmem_limit_bytes=32 * 1024 * 1024,
        ),
        cost_estimate=cost,
    )(x2d, w_t, b2d)

    return out2d.reshape(full_out_shape)


if __name__ == "__main__":
    # Config: aggregation='dm' -> scale=2, hidden_size=32, num_labels=8
    hidden_size = 32
    scale = 2
    in_features = hidden_size * scale   # 64
    num_labels = 8
    batch, seq = 2, 8

    key = jax.random.PRNGKey(0)
    kx, kw, kb = jax.random.split(key, 3)

    # Deterministic parameter init (uniform, like PyTorch's default Linear init)
    bound = 1.0 / (in_features ** 0.5)
    weight = jax.random.uniform(kw, (num_labels, in_features),
                                minval=-bound, maxval=bound,
                                dtype=jnp.float32)
    bias = jax.random.uniform(kb, (num_labels,),
                              minval=-bound, maxval=bound,
                              dtype=jnp.float32)

    # hidden_state: [batch, seq, hidden_size * scale]
    hidden_state = jax.random.normal(kx, (batch, seq, in_features),
                                     dtype=jnp.float32)

    logits = classification_head(hidden_state, weight, bias)
    logits = jax.block_until_ready(logits)
    assert logits.shape == (batch, seq, num_labels)

    # Reference: pure f32 nn.Linear math. Tolerance covers the MXU's matmul
    # pass decomposition while still validating the bias add and layout.
    ref_f32 = hidden_state @ weight.T + bias
    assert jnp.allclose(logits, ref_f32, atol=2e-2, rtol=2e-2), (
        float(jnp.max(jnp.abs(logits - ref_f32))))

    print("KERNEL_OK")
</pallas_src>

<mosaic_0001>
module attributes {stable_mosaic.version = 11 : i64} {
  func.func @_linear_kernel(%arg0: i32, %arg1: memref<8x64xf32, #tpu.memory_space<vmem>>, %arg2: memref<64x8xf32, #tpu.memory_space<vmem>>, %arg3: memref<1x8xf32, #tpu.memory_space<vmem>>, %arg4: memref<8x8xf32, #tpu.memory_space<vmem>>) attributes {dimension_semantics = [#tpu.dimension_semantics<parallel>], iteration_bounds = array<i64: 2>, scalar_prefetch = 0 : i64, scratch_operands = 0 : i64, tpu.core_type = #tpu.core_type<tc>, window_params = [{transform_indices = @transform_0, window_bounds = array<i64: 8, 64>}, {pipeline_mode = #tpu.pipeline_mode<synchronous>, transform_indices = @transform_1, window_bounds = array<i64: 64, 8>}, {pipeline_mode = #tpu.pipeline_mode<synchronous>, transform_indices = @transform_2, window_bounds = array<i64: 1, 8>}, {transform_indices = @transform_3, window_bounds = array<i64: 8, 8>}]} {
    %c0 = arith.constant 0 : index
    %c0_0 = arith.constant 0 : index
    %0 = vector.load %arg1[%c0, %c0_0] : memref<8x64xf32, #tpu.memory_space<vmem>>, vector<8x64xf32>
    %c0_1 = arith.constant 0 : index
    %c0_2 = arith.constant 0 : index
    %1 = vector.load %arg2[%c0_1, %c0_2] : memref<64x8xf32, #tpu.memory_space<vmem>>, vector<64x8xf32>
    %cst = arith.constant dense<0.000000e+00> : vector<8x8xf32>
    %2 = tpu.matmul %0, %1, %cst {dimension_numbers = #tpu.dot_dimension_numbers<[1], [0], [0], [1], [0, 0, 1, 1], [], []>} : vector<8x64xf32>, vector<64x8xf32>, vector<8x8xf32> -> vector<8x8xf32>
    %c0_3 = arith.constant 0 : index
    %c0_4 = arith.constant 0 : index
    %3 = vector.load %arg3[%c0_3, %c0_4] : memref<1x8xf32, #tpu.memory_space<vmem>>, vector<1x8xf32>
    %4 = vector.broadcast %3 : vector<1x8xf32> to vector<8x8xf32>
    %5 = arith.addf %2, %4 : vector<8x8xf32>
    %c0_5 = arith.constant 0 : index
    %c0_6 = arith.constant 0 : index
    %6 = vector.load %arg4[%c0_5, %c0_6] : memref<8x8xf32, #tpu.memory_space<vmem>>, vector<8x8xf32>
    tpu.vector_store %arg4[%c0_5, %c0_6], %5 {strides = array<i32>} : memref<8x8xf32, #tpu.memory_space<vmem>>, vector<8x8xf32>,
    return
  }
  func.func @transform_0(%arg0: i32) -> (i32, i32) {
    %c0_i32 = arith.constant 0 : i32
    %c0_i32_0 = arith.constant 0 : i32
    return %arg0, %c0_i32 : i32, i32
  }
  func.func @transform_1(%arg0: i32) -> (i32, i32) {
    %c0_i32 = arith.constant 0 : i32
    %c0_i32_0 = arith.constant 0 : i32
    %c0_i32_1 = arith.constant 0 : i32
    return %c0_i32, %c0_i32_0 : i32, i32
  }
  func.func @transform_2(%arg0: i32) -> (i32, i32) {
    %c0_i32 = arith.constant 0 : i32
    %c0_i32_0 = arith.constant 0 : i32
    %c0_i32_1 = arith.constant 0 : i32
    return %c0_i32, %c0_i32_0 : i32, i32
  }
  func.func @transform_3(%arg0: i32) -> (i32, i32) {
    %c0_i32 = arith.constant 0 : i32
    %c0_i32_0 = arith.constant 0 : i32
    return %arg0, %c0_i32 : i32, i32
  }
}

</mosaic_0001>

<llo_original>
// kernel: tpu_custom_call.1
$region0: #{tpu_custom_call.1}
  #allocation0 [shape = 'u32[]', space=smem, size = 0x4, offset = 0x4, fixed_abs, tag = 'smem constant byte address 0x4 - core index']
  #allocation1 [shape = 'u32[144,128]{1,0:T(1,128)}', space=vmem, size = 0x12000, scoped, tag = 'internal scratch']
  %s0 = inlined_call_operand.vmem [shape: f32[16,64], index: 0, kind: input, shape index: {}]
  %s1 = inlined_call_operand.vmem [shape: f32[64,8], index: 1, kind: input, shape index: {}]
  %s2 = inlined_call_operand.vmem [shape: f32[1,8], index: 2, kind: input, shape index: {}]
  %s3 = inlined_call_operand.vmem [shape: f32[16,8], index: 3, kind: output, shape index: {}]
  %s4 = sld [smem:[#allocation0]]
  $region45: #{tpu_custom_call.1} parent=0
    _
  %s6 = ssub.s32 1, %s4
  %s7 = scalar_select 0, %s6, %s4
  loop: start=0, step=1, limit=4
  $region2: #{tpu_custom_call.1} parent=0 // loop_pre_header
    _
  $region3: #{tpu_custom_call.1} parent=0 // loop_header
    %s9 = sphi 0, %s13
    %p10 = scmp.ge.s32.totalorder %s9, 4
    %s19 = sphi 0, %s21
    %s22 = sphi 0, %s19
    %s23 = sphi 0, %s22
    %s39 = sphi 0, %s23
    %s43 = sphi 0, %s43
    %s45 = sphi 0, %s43
    %s46 = sphi 0, %s45
    %s60 = sphi 0, %s46
    %s64 = sphi 0, %s64
    %s66 = sphi 0, %s64
    %s67 = sphi 0, %s66
    %s81 = sphi 0, %s67
    %s87 = sphi 0, %s89
    %s90 = sphi 0, %s87
    %s91 = sphi 0, %s90
    %s107 = sphi 0, %s91
  $region4: #{tpu_custom_call.1} parent=0 // loop_header_branch
    %12 = sbr.rel (%p10) target = $region8
  $region5: #{tpu_custom_call.1} parent=0 // loop_body
    %s14 = ssub.s32 %s9, 1
    %s15 = ssub.s32 %s9, 2
    %s16 = sadd.s32 %s9, 1
    %s17 = ssub.s32 %s9, %s16
    %p18 = scmp.eq.s32.totalorder %s17, 0
    %s20 = sadd.s32 %s19, 1
    %s21 = scalar_select %p18, %s19, %s20
    %p24 = pneg %p18
    %p25 = scmp.eq.s32.totalorder %s9, 1
    %p26 = por %p24, %p25
    %p27 = scmp.ne.s32.totalorder %s19, %s22
    %p28 = scmp.eq.s32.totalorder %s9, 0
    %p29 = por %p27, %p28
    %p30 = scmp.ne.s32.totalorder %s19, %s22
    %p31 = scmp.eq.s32.totalorder %s14, 1
    %p32 = por %p30, %p31
    %p33 = scmp.ne.s32.totalorder %s22, %s23
    %p34 = scmp.eq.s32.totalorder %s14, 0
    %p35 = por %p33, %p34
    %p36 = scmp.ne.s32.totalorder %s22, %s23
    %p37 = scmp.eq.s32.totalorder %s15, 1
    %p38 = por %p36, %p37
    %p40 = scmp.ne.s32.totalorder %s23, %s39
    %p41 = scmp.eq.s32.totalorder %s15, 0
    %p42 = por %p40, %p41
    %s44 = sadd.s32 %s43, 1
    %p47 = scmp.eq.s32.totalorder %s9, 1
    %p48 = scmp.ne.s32.totalorder %s43, %s45
    %p49 = scmp.eq.s32.totalorder %s9, 0
    %p50 = por %p48, %p49
    %p51 = scmp.ne.s32.totalorder %s43, %s45
    %p52 = scmp.eq.s32.totalorder %s14, 1
    %p53 = por %p51, %p52
    %p54 = scmp.ne.s32.totalorder %s45, %s46
    %p55 = scmp.eq.s32.totalorder %s14, 0
    %p56 = por %p54, %p55
    %p57 = scmp.ne.s32.totalorder %s45, %s46
    %p58 = scmp.eq.s32.totalorder %s15, 1
    %p59 = por %p57, %p58
    %p61 = scmp.ne.s32.totalorder %s46, %s60
    %p62 = scmp.eq.s32.totalorder %s15, 0
    %p63 = por %p61, %p62
    %s65 = sadd.s32 %s64, 1
    %p68 = scmp.eq.s32.totalorder %s9, 1
    %p69 = scmp.ne.s32.totalorder %s64, %s66
    %p70 = scmp.eq.s32.totalorder %s9, 0
    %p71 = por %p69, %p70
    %p72 = scmp.ne.s32.totalorder %s64, %s66
    %p73 = scmp.eq.s32.totalorder %s14, 1
    %p74 = por %p72, %p73
    %p75 = scmp.ne.s32.totalorder %s66, %s67
    %p76 = scmp.eq.s32.totalorder %s14, 0
    %p77 = por %p75, %p76
    %p78 = scmp.ne.s32.totalorder %s66, %s67
    %p79 = scmp.eq.s32.totalorder %s15, 1
    %p80 = por %p78, %p79
    %p82 = scmp.ne.s32.totalorder %s67, %s81
    %p83 = scmp.eq.s32.totalorder %s15, 0
    %p84 = por %p82, %p83
    %s85 = ssub.s32 %s9, %s16
    %p86 = scmp.eq.s32.totalorder %s85, 0
    %s88 = sadd.s32 %s87, 1
    %s89 = scalar_select %p86, %s87, %s88
    %p92 = pneg %p86
    %p93 = scmp.eq.s32.totalorder %s9, 1
    %p94 = por %p92, %p93
    %p95 = scmp.ne.s32.totalorder %s87, %s90
    %p96 = scmp.eq.s32.totalorder %s9, 0
    %p97 = por %p95, %p96
    %p98 = scmp.ne.s32.totalorder %s87, %s90
    %p99 = scmp.eq.s32.totalorder %s14, 1
    %p100 = por %p98, %p99
    %p101 = scmp.ne.s32.totalorder %s90, %s91
    %p102 = scmp.eq.s32.totalorder %s14, 0
    %p103 = por %p101, %p102
    %p104 = scmp.ne.s32.totalorder %s90, %s91
    %p105 = scmp.eq.s32.totalorder %s15, 1
    %p106 = por %p104, %p105
    %p108 = scmp.ne.s32.totalorder %s91, %s107
    %p109 = scmp.eq.s32.totalorder %s15, 0
    %p110 = por %p108, %p109
    %p111 = scmp.le.s32.totalorder 1, %s9
    %p112 = scmp.lt.s32.totalorder %s9, 3
    %p113 = pnand %p111, %p112
    %p114 = pneg %p113
    // Predicated region
    $region9: #{tpu_custom_call.1} parent=5 // pred_check
      _
    $region10: #{tpu_custom_call.1} parent=5 // pred_check_branch
      %116 = sbr.rel (%p113) target = $region12
    $region11: #{tpu_custom_call.1} parent=5 // pred_region
      %s117 = ssub.s32 %s9, 1
      // Predicated region
      $region13: #{tpu_custom_call.1} parent=11 // pred_check
        %p118 = pneg %p56
      $region14: #{tpu_custom_call.1} parent=11 // pred_check_branch
        %120 = sbr.rel (%p118) target = $region16
      $region15: #{tpu_custom_call.1} parent=11 // pred_region
        _
      $region16: #{tpu_custom_call.1} parent=11 // pred_fallthru
        _
      // Predicated region
      $region17: #{tpu_custom_call.1} parent=11 // pred_check
        %p121 = pneg %p77
      $region18: #{tpu_custom_call.1} parent=11 // pred_check_branch
        %123 = sbr.rel (%p121) target = $region20
      $region19: #{tpu_custom_call.1} parent=11 // pred_region
        _
      $region20: #{tpu_custom_call.1} parent=11 // pred_fallthru
        _
    $region12: #{tpu_custom_call.1} parent=5 // pred_fallthru
      _
    %p124 = scmp.lt.s32.totalorder %s9, 2
    // Predicated region
    $region21: #{tpu_custom_call.1} parent=5 // pred_check
      %p125 = pneg %p124
    $region22: #{tpu_custom_call.1} parent=5 // pred_check_branch
      %127 = sbr.rel (%p125) target = $region24
    $region23: #{tpu_custom_call.1} parent=5 // pred_region
      // Predicated region
      $region25: #{tpu_custom_call.1} parent=23 // pred_check
        %p128 = pneg %p29
      $region26: #{tpu_custom_call.1} parent=23 // pred_check_branch
        %130 = sbr.rel (%p128) target = $region28
      $region27: #{tpu_custom_call.1} parent=23 // pred_region
        %p131 = scmp.lt.s32.totalorder %s9, 1
        %s132 = scalar_select %p131, %s9, 1
        %s133 = smul.addr %s132, 8
        %s134 = scalar_lea.vmem %s0, %s133
      $region28: #{tpu_custom_call.1} parent=23 // pred_fallthru
        _
    $region24: #{tpu_custom_call.1} parent=5 // pred_fallthru
      _
    %p135 = scmp.le.s32.totalorder 1, %s9
    %p136 = scmp.lt.s32.totalorder %s9, 3
    %p137 = pnand %p135, %p136
    %p138 = pneg %p137
    // Predicated region
    $region29: #{tpu_custom_call.1} parent=5 // pred_check
      _
    $region30: #{tpu_custom_call.1} parent=5 // pred_check_branch
      %140 = sbr.rel (%p137) target = $region32
    $region31: #{tpu_custom_call.1} parent=5 // pred_region
      %s141 = ssub.s32 %s9, 1
      %p142 = scmp.lt.s32.totalorder %s14, 1
      %s143 = scalar_select %p142, %s14, 1
      %s144 = smul.addr %s143, 8
      %s145 = scalar_lea.vmem %s0, %s144
      %p146 = pneg %p35
      %p147 = pneg %p32
      %p148 = pneg %p56
      %p149 = pneg %p53
      %p150 = pneg %p77
      %p151 = pneg %p74
      %p152 = pneg %p103
      %p153 = pneg %p100
      %p154 = scmp.lt.s32.totalorder %s14, 1
      %s155 = scalar_select %p154, %s14, 1
      %s156 = smul.addr %s155, 8
      %s157 = scalar_lea.vmem %s3, %s156
      %p158 = scmp.lt.s32.totalorder %s14, 1
      %s159 = scalar_select %p158, %s14, 1
      %s160 = smul.addr %s159, 8
      %s161 = scalar_lea.vmem %s0, %s160
      %p162 = scmp.lt.s32.totalorder %s14, 1
      %s163 = scalar_select %p162, %s14, 1
      %s164 = smul.addr %s163, 8
      %s165 = scalar_lea.vmem %s3, %s164
      %v166 = vld [vmem:[%s161] sm:$0xff]
      %v167 = vld [vmem:[%s1] sm:$0xff]
      %v168 = vld [vmem:[%s1 + $0x8] sm:$0xff]
      %v169 = vld [vmem:[%s1 + $0x10] sm:$0xff]
      %v170 = vld [vmem:[%s1 + $0x18] sm:$0xff]
      %v171 = vld [vmem:[%s1 + $0x20] sm:$0xff]
      %v172 = vld [vmem:[%s1 + $0x28] sm:$0xff]
      %v173 = vld [vmem:[%s1 + $0x30] sm:$0xff]
      %v174 = vld [vmem:[%s1 + $0x38] sm:$0xff]
      %v175 = vld [vmem:[%s2] sm:$0x1]
      %v177 = vlaneseq
      %v178 = vshrl.u32 %v177, 7
      %v179 = vsub.s32 0, %v178
      %v180 = vrot.slane %v175, %v179
      %vm182 = vcmask 523264
      %v184 = vsel %vm182, %v166, 0
      %186 = vmatprep.subr.mxu0 0.0
      %187 = vmatpush1.msra.mxu0 %v167
      %188 = vmatprep.subr.mxu0 0.0
      %189 = vmatpush1.msra.mxu0 %v168
      %190 = vmatprep.subr.mxu0 0.0
      %191 = vmatpush1.msra.mxu0 %v169
      %192 = vmatprep.subr.mxu0 0.0
      %193 = vmatpush1.msra.mxu0 %v170
      %194 = vmatprep.subr.mxu0 0.0
      %195 = vmatpush1.msra.mxu0 %v171
      %196 = vmatprep.subr.mxu0 0.0
      %197 = vmatpush1.msra.mxu0 %v172
      %198 = vmatprep.subr.mxu0 0.0
      %199 = vmatpush1.msra.mxu0 %v173
      %200 = vmatprep.subr.mxu0 0.0
      %201 = vmatpush1.msra.mxu0 %v174
      %202 = vmatprep.subr.mxu0 0.0
      %203 = vmatpush1.msra.mxu0 0.0
      %204 = vmatprep.subr.mxu0 0.0
      %205 = vmatpush1.msra.mxu0 0.0
      %206 = vmatprep.subr.mxu0 0.0
      %207 = vmatpush1.msra.mxu0 0.0
      %208 = vmatprep.subr.mxu0 0.0
      %209 = vmatpush1.msra.mxu0 0.0
      %210 = vmatprep.subr.mxu0 0.0
      %211 = vmatpush1.msra.mxu0 0.0
      %212 = vmatprep.subr.mxu0 0.0
      %213 = vmatpush1.msra.mxu0 0.0
      %214 = vmatprep.subr.mxu0 0.0
      %215 = vmatpush1.msra.mxu0 0.0
      %216 = vmatprep.subr.mxu0 0.0
      %217 = vmatpush1.msra.mxu0 0.0
      %218 = vmatprep.subr.mxu0 0.0
      %219 = vmatpush1.msra.mxu0 0.0
      %220 = vmatprep.subr.mxu0 0.0
      %221 = vmatpush1.msra.mxu0 0.0
      %222 = vmatprep.subr.mxu0 0.0
      %223 = vmatpush1.msra.mxu0 0.0
      %224 = vmatprep.subr.mxu0 0.0
      %225 = vmatpush1.msra.mxu0 0.0
      %226 = vmatprep.subr.mxu0 0.0
      %227 = vmatpush1.msra.mxu0 0.0
      %228 = vmatprep.subr.mxu0 0.0
      %229 = vmatpush1.msra.mxu0 0.0
      %230 = vmatprep.subr.mxu0 0.0
      %231 = vmatpush1.msra.mxu0 0.0
      %232 = vmatprep.subr.mxu0 0.0
      %233 = vmatpush1.msra.mxu0 0.0
      %234 = vmatprep.subr.mxu0 0.0
      %235 = vmatpush1.msra.mxu0 0.0
      %236 = vmatprep.subr.mxu0 0.0
      %237 = vmatpush1.msra.mxu0 0.0
      %238 = vmatprep.subr.mxu0 0.0
      %239 = vmatpush1.msra.mxu0 0.0
      %240 = vmatprep.subr.mxu0 0.0
      %241 = vmatpush1.msra.mxu0 0.0
      %242 = vmatprep.subr.mxu0 0.0
      %243 = vmatpush1.msra.mxu0 0.0
      %244 = vmatprep.subr.mxu0 0.0
      %245 = vmatpush1.msra.mxu0 0.0
      %246 = vmatprep.subr.mxu0 0.0
      %247 = vmatpush1.msra.mxu0 0.0
      %248 = vmatprep.subr.mxu0 0.0
      %249 = vmatpush1.msra.mxu0 0.0
      %250 = vmatprep.mubr.f32.mxu0 0.0
      %251 = vmatmul.mubr.f32.gmra.mrb[0].mxu0 %v184
      %v252 = vpop.f32.mrb[0].mxu0
      %v253 = vadd.f32 %v180, %v252
      %v254 = vpop.f32.mrb[0].mxu0
      %255 = vdwg.mxu0
      %vm256 = vcmask 64512
      %257 = vst.msk [vmem:[%s165] sm:$0xff] %vm256, %v253
      %p258 = scmp.lt.s32.totalorder %s14, 1
      %s259 = scalar_select %p258, %s14, 1
      %s260 = smul.addr %s259, 8
      %s261 = scalar_lea.vmem %s3, %s260
      // Predicated region
      $region33: #{tpu_custom_call.1} parent=31 // pred_check
        %p262 = pneg %p100
      $region34: #{tpu_custom_call.1} parent=31 // pred_check_branch
        %264 = sbr.rel (%p262) target = $region36
      $region35: #{tpu_custom_call.1} parent=31 // pred_region
        _
      $region36: #{tpu_custom_call.1} parent=31 // pred_fallthru
        _
    $region32: #{tpu_custom_call.1} parent=5 // pred_fallthru
      _
    %p265 = scmp.le.s32.totalorder 2, %s9
    // Predicated region
    $region37: #{tpu_custom_call.1} parent=5 // pred_check
      %p266 = pneg %p265
    $region38: #{tpu_custom_call.1} parent=5 // pred_check_branch
      %268 = sbr.rel (%p266) target = $region40
    $region39: #{tpu_custom_call.1} parent=5 // pred_region
      %s269 = ssub.s32 %s9, 2
      // Predicated region
      $region41: #{tpu_custom_call.1} parent=39 // pred_check
        %p270 = pneg %p106
      $region42: #{tpu_custom_call.1} parent=39 // pred_check_branch
        %272 = sbr.rel (%p270) target = $region44
      $region43: #{tpu_custom_call.1} parent=39 // pred_region
        %p273 = scmp.lt.s32.totalorder %s15, 1
        %s274 = scalar_select %p273, %s15, 1
        %s275 = smul.addr %s274, 8
        %s276 = scalar_lea.vmem %s3, %s275
      $region44: #{tpu_custom_call.1} parent=39 // pred_fallthru
        _
    $region40: #{tpu_custom_call.1} parent=5 // pred_fallthru
      _
  $region6: #{tpu_custom_call.1} parent=0 // loop_footer
    %s13 = sadd.s32 1, %s9
  $region7: #{tpu_custom_call.1} parent=0 // loop_footer_branch
    %8 = sbr.rel target = $region3
  $region8: #{tpu_custom_call.1} parent=0 // loop_exit
    _

</llo_original>
